<compile_context>
chip_gen: v7x
topology: tpu7x:2x2x1
jax: 0.10.0
libtpu: 0.0.40
codegen_flags: <defaults>
</compile_context>

<pallas_src>
import functools

import jax
import jax.numpy as jnp
from jax.experimental import pallas as pl
from jax.experimental.pallas import tpu as pltpu


def _make_swish_kernel(compute_dtype):
    def _swish_kernel(x_ref, o_ref):
        # x * sigmoid(x) == (0.5*x) * (1 + tanh(0.5*x)).
        # h is computed exactly once (don't rely on CSE); tanh -> EUP slot.
        h = 0.5 * x_ref[...].astype(compute_dtype)
        y = h * (1.0 + jnp.tanh(h))
        o_ref[...] = y.astype(o_ref.dtype)

    return _swish_kernel


@functools.lru_cache(maxsize=None)
def _chip_config():
    """Returns (block_bytes, vmem_limit_bytes, bf16_compute_ok) for this chip."""
    kind = ""
    try:
        kind = jax.devices()[0].device_kind.lower()
    except Exception:
        pass
    vmem_bytes = None
    try:
        vmem_bytes = int(pltpu.get_tpu_info().vmem_capacity_bytes)
    except Exception:
        vmem_bytes = None
    if vmem_bytes is None:
        # v7x has 64 MiB VMEM per TensorCore; v5e/v6e have 128 MiB.
        vmem_bytes = (64 << 20) if "v7" in kind else (128 << 20)

    if vmem_bytes >= (96 << 20):
        # v5e / v6e (128 MiB VMEM): 16 MiB blocks -> 64 MiB resident (in+out,
        # double-buffered) under a 96 MiB scoped limit.
        block_bytes, vmem_limit = 16 << 20, 96 << 20
    else:
        # v7x (64 MiB / TC): keep 8 MiB blocks -> 32 MiB resident, 48 MiB limit.
        block_bytes, vmem_limit = 8 << 20, 48 << 20

    # v5e's VPU/EUP have no bf16 -> f32 compute is mandatory there.
    bf16_ok = ("v6" in kind) or ("v7" in kind)
    return block_bytes, vmem_limit, bf16_ok


def _compute_dtype(dtype, bf16_ok):
    if bf16_ok and dtype == jnp.bfloat16:
        return jnp.bfloat16
    return jnp.float32


def _swish_flat(x_flat):
    """Swish on a 1-D array whose length is a (nonzero) multiple of 128."""
    n = x_flat.shape[0]
    dtype = x_flat.dtype
    itemsize = jnp.dtype(dtype).itemsize
    block_bytes, vmem_limit, bf16_ok = _chip_config()
    cdt = _compute_dtype(dtype, bf16_ok)

    # Sublane alignment: 8 rows for 32-bit, 16 for bf16/f16, 32 for 8-bit.
    row_align = 8 * max(1, 4 // itemsize)

    # Widest lane-dense last dim that divides n (128 always divides n here).
    lane = 128
    for w in (1024, 512, 256):
        if n % w == 0:
            lane = w
            break

    rows = n // lane
    x2d = x_flat.reshape(rows, lane)

    if rows <= row_align:
        # Tiny input: block equals the full array (allowed even if rows < 8).
        tile_rows = rows
    else:
        target_rows = max(row_align, block_bytes // (lane * itemsize))
        tile_rows = min(rows, target_rows)
        tile_rows = max(row_align, (tile_rows // row_align) * row_align)
        # Guarantee >= 2 grid steps so the ("parallel",) axis can be sharded
        # across both v7x TensorCores; harmless (~0.35 us) on 1-TC chips.
        if pl.cdiv(rows, tile_rows) < 2:
            half = pl.cdiv(rows, 2)
            half = ((half + row_align - 1) // row_align) * row_align
            tile_rows = max(row_align, min(tile_rows, half))

    grid = (pl.cdiv(rows, tile_rows),)  # ragged last block handled by Pallas

    out2d = pl.pallas_call(
        _make_swish_kernel(cdt),
        out_shape=jax.ShapeDtypeStruct((rows, lane), dtype),
        grid_spec=pltpu.PrefetchScalarGridSpec(
            num_scalar_prefetch=0,
            grid=grid,
            in_specs=[pl.BlockSpec((tile_rows, lane), lambda i: (i, 0))],
            out_specs=pl.BlockSpec((tile_rows, lane), lambda i: (i, 0)),
        ),
        compiler_params=pltpu.CompilerParams(
            dimension_semantics=("parallel",),
            vmem_limit_bytes=vmem_limit,
        ),
    )(x2d)
    return out2d.reshape(-1)


def _swish_plain(x):
    """Plain-JAX Swish for the (rare) sub-128-element tail."""
    _, _, bf16_ok = _chip_config()
    xf = x.astype(_compute_dtype(x.dtype, bf16_ok))
    return (xf * jax.nn.sigmoid(xf)).astype(x.dtype)


def swish(x: jax.Array) -> jax.Array:
    """Elementwise Swish (x * sigmoid(x)) for float inputs of any shape."""
    # TODO(synk): float64 / integer inputs are round-tripped through float32.
    orig_shape = x.shape
    n = x.size
    if n == 0:
        return x

    x_flat = jnp.ravel(x)
    n_main = (n // 128) * 128  # 128-aligned prefix goes through the kernel

    if n_main == n:
        out_flat = _swish_flat(x_flat)
    elif n_main == 0:
        out_flat = _swish_plain(x_flat)  # fewer than 128 elements total
    else:
        # Ragged tail: kernel on the aligned prefix, plain JAX on the <128
        # element tail (cheaper than whole-array pad + slice HBM round trips).
        head = _swish_flat(x_flat[:n_main])
        tail = _swish_plain(x_flat[n_main:])
        out_flat = jnp.concatenate([head, tail])

    return out_flat.reshape(orig_shape)


if __name__ == "__main__":
    key = jax.random.PRNGKey(0)
    # NCHW input consistent with typical conv-block usage of Swish.
    x = jax.random.normal(key, (2, 4, 16, 16), dtype=jnp.float32)

    y = swish(x)
    jax.block_until_ready(y)

    # Reference check against plain JAX x * sigmoid(x).
    y_ref = x * jax.nn.sigmoid(x)
    assert y.shape == x.shape and y.dtype == x.dtype
    assert float(jnp.max(jnp.abs(y - y_ref))) < 1e-5

    print("KERNEL_OK")
</pallas_src>

<mosaic_0001>
module attributes {stable_mosaic.version = 11 : i64} {
  func.func @_swish_kernel(%arg0: i32, %arg1: memref<2x1024xf32, #tpu.memory_space<vmem>>, %arg2: memref<2x1024xf32, #tpu.memory_space<vmem>>) attributes {dimension_semantics = [#tpu.dimension_semantics<parallel>], iteration_bounds = array<i64: 1>, scalar_prefetch = 0 : i64, scratch_operands = 0 : i64, tpu.core_type = #tpu.core_type<tc>, window_params = [{transform_indices = @transform_0, window_bounds = array<i64: 2, 1024>}, {transform_indices = @transform_1, window_bounds = array<i64: 2, 1024>}]} {
    %c0 = arith.constant 0 : index
    %c0_0 = arith.constant 0 : index
    %0 = vector.load %arg1[%c0, %c0_0] : memref<2x1024xf32, #tpu.memory_space<vmem>>, vector<2x1024xf32>
    %cst = arith.constant 5.000000e-01 : f32
    %1 = vector.broadcast %cst : f32 to vector<2x1024xf32>
    %2 = arith.mulf %1, %0 : vector<2x1024xf32>
    %3 = math.tanh %2 : vector<2x1024xf32>
    %cst_1 = arith.constant 1.000000e+00 : f32
    %4 = vector.broadcast %cst_1 : f32 to vector<2x1024xf32>
    %5 = arith.addf %4, %3 : vector<2x1024xf32>
    %6 = arith.mulf %2, %5 : vector<2x1024xf32>
    %c0_2 = arith.constant 0 : index
    %c0_3 = arith.constant 0 : index
    %7 = vector.load %arg2[%c0_2, %c0_3] : memref<2x1024xf32, #tpu.memory_space<vmem>>, vector<2x1024xf32>
    tpu.vector_store %arg2[%c0_2, %c0_3], %6 {strides = array<i32>} : memref<2x1024xf32, #tpu.memory_space<vmem>>, vector<2x1024xf32>,
    return
  }
  func.func @transform_0(%arg0: i32) -> (i32, i32) {
    %c0_i32 = arith.constant 0 : i32
    %c0_i32_0 = arith.constant 0 : i32
    return %arg0, %c0_i32 : i32, i32
  }
  func.func @transform_1(%arg0: i32) -> (i32, i32) {
    %c0_i32 = arith.constant 0 : i32
    %c0_i32_0 = arith.constant 0 : i32
    return %arg0, %c0_i32 : i32, i32
  }
}

</mosaic_0001>

<llo_original>
// kernel: tpu_custom_call.1
$region0: #{tpu_custom_call.1}
  #allocation0 [shape = 'u32[]', space=smem, size = 0x4, offset = 0x4, fixed_abs, tag = 'smem constant byte address 0x4 - core index']
  #allocation1 [shape = 'u32[144,128]{1,0:T(1,128)}', space=vmem, size = 0x12000, scoped, tag = 'internal scratch']
  %s0 = inlined_call_operand.hbm [shape: f32[2,1024], index: 0, kind: input, shape index: {}]
  %s1 = inlined_call_operand.hbm [shape: f32[2,1024], index: 1, kind: output, shape index: {}]
  %s2 = sld [smem:[#allocation0]]
  $region18: #{tpu_custom_call.1} parent=0
    _
  %s4 = ssub.s32 1, %s2
  %s5 = scalar_select 0, %s4, %s2
  $region1: #{tpu_custom_call.1} parent=0
    #allocation2 [shape = 'u8[8192]{0}', space=vmem, size = 0x2000, scoped, tag = 'input window, operand 0, single buffered']
    #allocation3 [shape = 's32[1]{0}', space=sflag, size = 0x4, scoped, tag = 'scoped memory for tpu_custom_call.1']
    #allocation4 [shape = 's32[1]{0}', space=sflag, size = 0x4, scoped, tag = 'scoped memory for tpu_custom_call.1']
    #allocation5 [shape = 'u8[8192]{0}', space=vmem, size = 0x2000, scoped, tag = 'output window, operand 0, single buffered']
    %6 = vsyncpa [#allocation3], 0
    %7 = vsyncpa [#allocation4], 0
    // Predicated region
    $region2: #{tpu_custom_call.1} parent=1 // pred_check
      _
    $region3: #{tpu_custom_call.1} parent=1 // pred_check_branch
      %9 = sbr.rel (0) target = $region5
    $region4: #{tpu_custom_call.1} parent=1 // pred_region
      %s11 = ssub.s32 256, 256
      %12 = vsyncadd [#allocation3], %s11
      %s14 = sshll.u32 [#allocation2], 4
      %s15 = int_to_ptr.vmem [resolvable:$true] %s14
      %17 = dma.hbm_to_vmem [thread:$0]  %s0, 256, %s15, [#allocation3]
    $region5: #{tpu_custom_call.1} parent=1 // pred_fallthru
      _
    // Predicated region
    $region6: #{tpu_custom_call.1} parent=1 // pred_check
      _
    $region7: #{tpu_custom_call.1} parent=1 // pred_check_branch
      %19 = sbr.rel (0) target = $region9
    $region8: #{tpu_custom_call.1} parent=1 // pred_region
      %20 = dma.done [#allocation3], 256
    $region9: #{tpu_custom_call.1} parent=1 // pred_fallthru
      _
    %v21 = vld [vmem:[#allocation2] sm:$0xff]
    %v22 = vld [vmem:[#allocation2 + $0x8] sm:$0xff]
    %v23 = vmul.f32 %v21, 0.5
    %v24 = vmul.f32 %v22, 0.5
    %v25 = vtanh.pop %v23
    %v26 = vtanh.pop %v24
    %v27 = vadd.f32 %v25, 1.0
    %v28 = vadd.f32 %v26, 1.0
    %v29 = vmul.f32 %v23, %v27
    %v30 = vmul.f32 %v24, %v28
    %31 = vst [vmem:[#allocation5] sm:$0xff] %v29
    %32 = vst [vmem:[#allocation5 + $0x8] sm:$0xff] %v30
    // Predicated region
    $region10: #{tpu_custom_call.1} parent=1 // pred_check
      _
    $region11: #{tpu_custom_call.1} parent=1 // pred_check_branch
      %34 = sbr.rel (0) target = $region13
    $region12: #{tpu_custom_call.1} parent=1 // pred_region
      %s36 = ssub.s32 256, 256
      %37 = vsyncadd [#allocation4], %s36
      %s39 = sshll.u32 [#allocation5], 4
      %s40 = int_to_ptr.vmem [resolvable:$true] %s39
      %42 = dma.vmem_to_hbm [thread:$0]  %s40, 256, %s1, [#allocation4]
    $region13: #{tpu_custom_call.1} parent=1 // pred_fallthru
      _
    // Predicated region
    $region14: #{tpu_custom_call.1} parent=1 // pred_check
      _
    $region15: #{tpu_custom_call.1} parent=1 // pred_check_branch
      %44 = sbr.rel (0) target = $region17
    $region16: #{tpu_custom_call.1} parent=1 // pred_region
      %45 = dma.done [#allocation4], 256
    $region17: #{tpu_custom_call.1} parent=1 // pred_fallthru
      _
    %46 = vsyncpa [#allocation3], 1
    %47 = vsyncpa [#allocation4], 1

</llo_original>
